<compile_context>
chip_gen: v5e
topology: v5e:2x2
jax: 0.10.0
libtpu: 0.0.40
codegen_flags: <defaults>
</compile_context>

<pallas_src>
import functools

import jax
import jax.numpy as jnp
from jax.experimental import pallas as pl
from jax.experimental.pallas import tpu as pltpu


_BLOCK_BYTE_CAP = 4 << 20       # ~4 MiB per x tile: (x + out) * 2 buffers ~= 16 MiB
_SCALE_RESIDENT_CAP = 2 << 20   # keep scale resident only while its lane-padded
                                # VMEM footprint (rows x 128 lanes) stays small
_VMEM_LIMIT = 32 << 20          # > v5e's 16 MiB default, well below v7x's 64 MiB


def _sublane_pack(dtype):
    """Sublane packing for this dtype (8 for f32, 16 for bf16, 32 for int8/fp8)."""
    return max(8, 32 // jnp.dtype(dtype).itemsize)


def _fold_small_batch(B, F, dtype):
    """Fold factor r: (B, F) -> (B*r, F//r) so tiny batches fill whole vregs."""
    pack = _sublane_pack(dtype)
    if B >= pack or F % 128 != 0:
        return 1
    r = 1
    while (B * r * 2 <= pack and F % (r * 2) == 0 and (F // (r * 2)) % 128 == 0):
        r *= 2
    return r


def _choose_tiles(B, F, dtype):
    """Pick (tb, tf): sublane-aligned rows x lane-aligned cols, <= ~4 MiB/block."""
    itemsize = jnp.dtype(dtype).itemsize
    pack = _sublane_pack(dtype)

    # Column (lane) tile: multiple of 128 (the cap never drops below 2048
    # elements, so per-row DMA segments stay >= 8 KiB), or the full dim when F
    # is not 128-aligned (full-dim blocks are required in that case).
    if F % 128 != 0:
        tf = F
    else:
        cap_cols = max(128, (_BLOCK_BYTE_CAP // (pack * itemsize)) // 128 * 128)
        tf = min(F, cap_cols)

    # Row (sublane) tile: multiple of the dtype packing, capped by block bytes.
    if B <= pack:
        tb = B
    else:
        rows = _BLOCK_BYTE_CAP // max(tf * itemsize, 1)
        tb = max(pack, (min(B, rows) // pack) * pack)

    # Guarantee >= 2 "parallel" grid steps when possible so v7x's second
    # TensorCore is not left idle for small batches.
    if pl.cdiv(B, tb) * pl.cdiv(F, tf) < 2:
        if tf % 256 == 0:
            tf //= 2
        elif tb >= 2 * pack:
            tb = ((tb // 2 + pack - 1) // pack) * pack
    return tb, tf


def _drop_path_kernel(scale_ref, x_ref, o_ref, *, scale_is_resident):
    """scale: (Bp, 1) resident or (tb, 1) streamed; x / out: (tb, tf) tiles."""
    if scale_is_resident:
        tb = x_ref.shape[0]
        r0 = pl.multiple_of(pl.program_id(0) * tb, tb)
        s = scale_ref[pl.ds(r0, tb), :]
    else:
        s = scale_ref[...]
    o_ref[...] = x_ref[...] * s          # per-row broadcast multiply (HBM-bound)


def _drop_path_pallas(x, scale, *, donate_x=False):
    """x: (B, ...) activations; scale: (B,) per-sample multiplier."""
    orig_shape = x.shape
    B = orig_shape[0]
    F = 1
    for d in orig_shape[1:]:
        F *= int(d)

    itemsize = jnp.dtype(x.dtype).itemsize
    xf = x.reshape(B, F)
    sf = scale.astype(x.dtype)

    # Fold tiny batches into more rows so stores use full vregs (free reshape).
    r = _fold_small_batch(B, F, x.dtype)
    if r > 1:
        Bw, Fw = B * r, F // r
        xf = xf.reshape(Bw, Fw)
        sf = jnp.repeat(sf, r)
    else:
        Bw, Fw = B, F
    sf = sf.reshape(Bw, 1)

    tb, tf = _choose_tiles(Bw, Fw, x.dtype)
    nbt = pl.cdiv(Bw, tb)
    nft = pl.cdiv(Fw, tf)

    # x / out are NOT padded: Pallas masks the ragged last tile's reads/writes.
    # Only the tiny (Bw,) scale is padded so the in-kernel row slice of the
    # ragged last row tile never reads past its VMEM buffer.
    Bp = nbt * tb
    if Bp != Bw:
        sf = jnp.pad(sf, ((0, Bp - Bw), (0, 0)))

    # Keep the per-sample scale resident in VMEM (constant block index -> no
    # per-step DMA); fall back to a per-row-tile block for huge batches where
    # the lane-padded resident copy would waste VMEM.
    scale_is_resident = Bp * 128 * itemsize <= _SCALE_RESIDENT_CAP
    if scale_is_resident:
        scale_spec = pl.BlockSpec((Bp, 1), lambda i, j: (0, 0))
    else:
        scale_spec = pl.BlockSpec((tb, 1), lambda i, j: (i, 0))

    kwargs = {}
    if donate_x:
        # Reuse x's HBM buffer for the output (x is input #1, out is output #0).
        kwargs["input_output_aliases"] = {1: 0}

    out = pl.pallas_call(
        functools.partial(_drop_path_kernel, scale_is_resident=scale_is_resident),
        out_shape=jax.ShapeDtypeStruct((Bw, Fw), x.dtype),
        grid_spec=pltpu.PrefetchScalarGridSpec(
            num_scalar_prefetch=0,
            grid=(nbt, nft),
            in_specs=[
                scale_spec,                                     # per-sample scale
                pl.BlockSpec((tb, tf), lambda i, j: (i, j)),    # activations tile
            ],
            out_specs=pl.BlockSpec((tb, tf), lambda i, j: (i, j)),
        ),
        compiler_params=pltpu.CompilerParams(
            dimension_semantics=("parallel", "parallel"),
            vmem_limit_bytes=_VMEM_LIMIT,
        ),
        **kwargs,
    )(sf, xf)

    return out.reshape(orig_shape)


# --------------------------------------------------------------------------
# Module-level forward (mirrors DropPath.forward / drop_path)
# --------------------------------------------------------------------------
def drop_path_forward(x, drop_prob=0.0, training=False, scale_by_keep=True,
                      key=None, donate_x=False):
    if drop_prob == 0.0 or not training:
        return x                                   # identity, as in PyTorch
    if key is None:
        raise ValueError("drop_path_forward(training=True, drop_prob>0) "
                         "requires an explicit jax.random key.")

    keep_prob = 1.0 - drop_prob
    B = x.shape[0]
    # TODO(synk): PyTorch draws the mask with torch's RNG; here the per-sample
    # Bernoulli uses jax.random (same distribution, different stream).
    mask = jax.random.bernoulli(key, keep_prob, (B,)).astype(x.dtype)
    if keep_prob > 0.0 and scale_by_keep:
        mask = mask / keep_prob
    return _drop_path_pallas(x, mask, donate_x=donate_x)


# --------------------------------------------------------------------------
# Self-test
# --------------------------------------------------------------------------
if __name__ == "__main__":
    key = jax.random.PRNGKey(0)
    kx, kmask = jax.random.split(key)

    # --- spec shape: x (2, 4, 16, 16), f32 --------------------------------
    B, C, H, W = 2, 4, 16, 16
    x = jax.random.normal(kx, (B, C, H, W), jnp.float32)
    drop_prob = 0.3
    keep_prob = 1.0 - drop_prob

    out_train = drop_path_forward(x, drop_prob=drop_prob, training=True,
                                  scale_by_keep=True, key=kmask)
    out_train = jax.block_until_ready(out_train)
    mask = jax.random.bernoulli(kmask, keep_prob, (B,)).astype(jnp.float32)
    ref_train = x * (mask / keep_prob).reshape(B, 1, 1, 1)
    assert out_train.shape == x.shape, out_train.shape
    assert jnp.allclose(out_train, ref_train, atol=1e-6, rtol=1e-6), (
        f"max abs err = {jnp.max(jnp.abs(out_train - ref_train))}")

    out_noscale = drop_path_forward(x, drop_prob=drop_prob, training=True,
                                    scale_by_keep=False, key=kmask)
    out_noscale = jax.block_until_ready(out_noscale)
    ref_noscale = x * mask.reshape(B, 1, 1, 1)
    assert jnp.allclose(out_noscale, ref_noscale, atol=1e-6, rtol=1e-6)

    out_eval = drop_path_forward(x, drop_prob=drop_prob, training=False)
    out_eval = jax.block_until_ready(out_eval)
    assert jnp.array_equal(out_eval, x)

    # --- bf16 + non-128-aligned feature dim (full-dim lane block path) ----
    k2 = jax.random.PRNGKey(7)
    x2 = jax.random.normal(kx, (5, 3, 24, 24), jnp.bfloat16)    # F = 1728
    out2 = drop_path_forward(x2, drop_prob=0.25, training=True,
                             scale_by_keep=True, key=k2)
    out2 = jax.block_until_ready(out2)
    mask2 = jax.random.bernoulli(k2, 0.75, (5,)).astype(jnp.bfloat16) / 0.75
    ref2 = x2 * mask2.reshape(5, 1, 1, 1)
    assert jnp.allclose(out2.astype(jnp.float32), ref2.astype(jnp.float32),
                        atol=1e-2, rtol=1e-2)

    # --- batch not a multiple of the row tile (ragged last tile, no pad) ---
    k3 = jax.random.PRNGKey(11)
    x3 = jax.random.normal(kx, (10, 8, 16, 16), jnp.float32)    # F = 2048
    out3 = drop_path_forward(x3, drop_prob=0.5, training=True,
                             scale_by_keep=True, key=k3)
    out3 = jax.block_until_ready(out3)
    mask3 = jax.random.bernoulli(k3, 0.5, (10,)).astype(jnp.float32) / 0.5
    ref3 = x3 * mask3.reshape(10, 1, 1, 1)
    assert out3.shape == x3.shape
    assert jnp.allclose(out3, ref3, atol=1e-6, rtol=1e-6)

    print("KERNEL_OK")
</pallas_src>

<mosaic_0001>
module attributes {stable_mosaic.version = 11 : i64} {
  func.func @_drop_path_kernel(%arg0: i32, %arg1: i32, %arg2: memref<8x1xf32, #tpu.memory_space<vmem>>, %arg3: memref<8x128xf32, #tpu.memory_space<vmem>>, %arg4: memref<8x128xf32, #tpu.memory_space<vmem>>) attributes {dimension_semantics = [#tpu.dimension_semantics<parallel>, #tpu.dimension_semantics<parallel>], iteration_bounds = array<i64: 1, 2>, scalar_prefetch = 0 : i64, scratch_operands = 0 : i64, tpu.core_type = #tpu.core_type<tc>, window_params = [{pipeline_mode = #tpu.pipeline_mode<synchronous>, transform_indices = @transform_0, window_bounds = array<i64: 8, 1>}, {transform_indices = @transform_1, window_bounds = array<i64: 8, 128>}, {transform_indices = @transform_2, window_bounds = array<i64: 8, 128>}]} {
    %c8_i32 = arith.constant 8 : i32
    %0 = arith.muli %arg0, %c8_i32 : i32
    %1 = tpu.assume_multiple %0, 8 : i32
    %2 = arith.index_cast %1 : i32 to index
    %c0 = arith.constant 0 : index
    %3 = vector.load %arg2[%2, %c0] : memref<8x1xf32, #tpu.memory_space<vmem>>, vector<8x1xf32>
    %c0_0 = arith.constant 0 : index
    %c0_1 = arith.constant 0 : index
    %4 = vector.load %arg3[%c0_0, %c0_1] : memref<8x128xf32, #tpu.memory_space<vmem>>, vector<8x128xf32>
    %5 = vector.broadcast %3 : vector<8x1xf32> to vector<8x128xf32>
    %6 = arith.mulf %4, %5 : vector<8x128xf32>
    %c0_2 = arith.constant 0 : index
    %c0_3 = arith.constant 0 : index
    %7 = vector.load %arg4[%c0_2, %c0_3] : memref<8x128xf32, #tpu.memory_space<vmem>>, vector<8x128xf32>
    tpu.vector_store %arg4[%c0_2, %c0_3], %6 {strides = array<i32>} : memref<8x128xf32, #tpu.memory_space<vmem>>, vector<8x128xf32>,
    return
  }
  func.func @transform_0(%arg0: i32, %arg1: i32) -> (i32, i32) {
    %c0_i32 = arith.constant 0 : i32
    %c0_i32_0 = arith.constant 0 : i32
    %c0_i32_1 = arith.constant 0 : i32
    return %c0_i32, %c0_i32_0 : i32, i32
  }
  func.func @transform_1(%arg0: i32, %arg1: i32) -> (i32, i32) {
    %c0_i32 = arith.constant 0 : i32
    return %arg0, %arg1 : i32, i32
  }
  func.func @transform_2(%arg0: i32, %arg1: i32) -> (i32, i32) {
    %c0_i32 = arith.constant 0 : i32
    return %arg0, %arg1 : i32, i32
  }
}

</mosaic_0001>

<llo_original>
// kernel: tpu_custom_call.1
$region0: #{tpu_custom_call.1}
  #allocation0 [shape = 'u32[]', space=smem, size = 0x4, offset = 0x4, fixed_abs, tag = 'smem constant byte address 0x4 - core index']
  #allocation1 [shape = 'u32[72,128]{1,0:T(1,128)}', space=vmem, size = 0x9000, scoped, tag = 'internal scratch']
  %s0 = inlined_call_operand.vmem [shape: f32[8,1], index: 0, kind: input, shape index: {}]
  %s1 = inlined_call_operand.hbm [shape: f32[8,256], index: 1, kind: input, shape index: {}]
  %s2 = inlined_call_operand.hbm [shape: f32[8,256], index: 2, kind: output, shape index: {}]
  %s3 = sld [smem:[#allocation0]]
  $region45: #{tpu_custom_call.1} parent=0
    _
  %s5 = ssub.s32 1, %s3
  %s6 = scalar_select 0, %s5, %s3
  $region1: #{tpu_custom_call.1} parent=0
    #allocation2 [shape = 'u8[8192]{0}', space=vmem, size = 0x2000, scoped, tag = 'input window, operand 1']
    #allocation3 [shape = 's32[2]{0}', space=sflag, size = 0x8, scoped, tag = 'scoped memory for tpu_custom_call.1']
    #allocation4 [shape = 's32[2]{0}', space=sflag, size = 0x8, scoped, tag = 'scoped memory for tpu_custom_call.1']
    #allocation5 [shape = 'u8[8192]{0}', space=vmem, size = 0x2000, scoped, tag = 'output window, operand 0']
    %7 = vsyncpa [#allocation3], 0
    %s8 = scalar_lea.sflag [#allocation3], 1
    %9 = vsyncpa %s8, 0
    %10 = vsyncpa [#allocation4], 0
    %s11 = scalar_lea.sflag [#allocation4], 1
    %12 = vsyncpa %s11, 0
    loop: start=0, step=1, limit=4
    $region2: #{tpu_custom_call.1} parent=1 // loop_pre_header
      _
    $region3: #{tpu_custom_call.1} parent=1 // loop_header
      %s14 = sphi 0, %s18
      %p15 = scmp.ge.s32.totalorder %s14, 4
      %s21 = sphi 0, %s33
      %s22 = sphi 0, %s29
      %s23 = sphi 0, %s21
      %s24 = sphi 0, %s22
      %s25 = sphi 0, %s23
      %s26 = sphi 0, %s24
      %s34 = sphi 0, %s34
      %s36 = sphi 0, %s34
      %s37 = sphi 0, %s36
      %s51 = sphi 0, %s37
      %s59 = sphi 0, %s61
      %s62 = sphi 0, %s59
      %s63 = sphi 0, %s62
      %s79 = sphi 0, %s63
      %s87 = sphi 0, %s89
      %s90 = sphi 0, %s87
      %s91 = sphi 0, %s90
      %s107 = sphi 0, %s91
    $region4: #{tpu_custom_call.1} parent=1 // loop_header_branch
      %17 = sbr.rel (%p15) target = $region8
    $region5: #{tpu_custom_call.1} parent=1 // loop_body
      %s19 = ssub.s32 %s14, 1
      %s20 = ssub.s32 %s14, 2
      %s27 = sadd.s32 1, %s22
      %p28 = scmp.ge.s32.totalorder %s27, 2
      %s29 = scalar_select %p28, 0, %s27
      %s30 = sadd.s32 1, %s21
      %s31 = scalar_select %p28, %s30, %s21
      %p32 = scmp.ge.s32.totalorder %s31, 1
      %s33 = scalar_select %p32, 0, %s31
      %s35 = sadd.s32 %s34, 1
      %p38 = scmp.eq.s32.totalorder %s14, 1
      %p39 = scmp.ne.s32.totalorder %s34, %s36
      %p40 = scmp.eq.s32.totalorder %s14, 0
      %p41 = por %p39, %p40
      %p42 = scmp.ne.s32.totalorder %s34, %s36
      %p43 = scmp.eq.s32.totalorder %s19, 1
      %p44 = por %p42, %p43
      %p45 = scmp.ne.s32.totalorder %s36, %s37
      %p46 = scmp.eq.s32.totalorder %s19, 0
      %p47 = por %p45, %p46
      %p48 = scmp.ne.s32.totalorder %s36, %s37
      %p49 = scmp.eq.s32.totalorder %s20, 1
      %p50 = por %p48, %p49
      %p52 = scmp.ne.s32.totalorder %s37, %s51
      %p53 = scmp.eq.s32.totalorder %s20, 0
      %p54 = por %p52, %p53
      %s55 = ssub.s32 %s21, %s33
      %s56 = ssub.s32 %s22, %s29
      %s57 = sor.u32 %s55, %s56
      %p58 = scmp.eq.s32.totalorder %s57, 0
      %s60 = sadd.s32 %s59, 1
      %s61 = scalar_select %p58, %s59, %s60
      %p64 = pneg %p58
      %p65 = scmp.eq.s32.totalorder %s14, 1
      %p66 = por %p64, %p65
      %p67 = scmp.ne.s32.totalorder %s59, %s62
      %p68 = scmp.eq.s32.totalorder %s14, 0
      %p69 = por %p67, %p68
      %p70 = scmp.ne.s32.totalorder %s59, %s62
      %p71 = scmp.eq.s32.totalorder %s19, 1
      %p72 = por %p70, %p71
      %p73 = scmp.ne.s32.totalorder %s62, %s63
      %p74 = scmp.eq.s32.totalorder %s19, 0
      %p75 = por %p73, %p74
      %p76 = scmp.ne.s32.totalorder %s62, %s63
      %p77 = scmp.eq.s32.totalorder %s20, 1
      %p78 = por %p76, %p77
      %p80 = scmp.ne.s32.totalorder %s63, %s79
      %p81 = scmp.eq.s32.totalorder %s20, 0
      %p82 = por %p80, %p81
      %s83 = ssub.s32 %s21, %s33
      %s84 = ssub.s32 %s22, %s29
      %s85 = sor.u32 %s83, %s84
      %p86 = scmp.eq.s32.totalorder %s85, 0
      %s88 = sadd.s32 %s87, 1
      %s89 = scalar_select %p86, %s87, %s88
      %p92 = pneg %p86
      %p93 = scmp.eq.s32.totalorder %s14, 1
      %p94 = por %p92, %p93
      %p95 = scmp.ne.s32.totalorder %s87, %s90
      %p96 = scmp.eq.s32.totalorder %s14, 0
      %p97 = por %p95, %p96
      %p98 = scmp.ne.s32.totalorder %s87, %s90
      %p99 = scmp.eq.s32.totalorder %s19, 1
      %p100 = por %p98, %p99
      %p101 = scmp.ne.s32.totalorder %s90, %s91
      %p102 = scmp.eq.s32.totalorder %s19, 0
      %p103 = por %p101, %p102
      %p104 = scmp.ne.s32.totalorder %s90, %s91
      %p105 = scmp.eq.s32.totalorder %s20, 1
      %p106 = por %p104, %p105
      %p108 = scmp.ne.s32.totalorder %s91, %s107
      %p109 = scmp.eq.s32.totalorder %s20, 0
      %p110 = por %p108, %p109
      %p111 = scmp.le.s32.totalorder 1, %s14
      %p112 = scmp.lt.s32.totalorder %s14, 3
      %p113 = pnand %p111, %p112
      %p114 = pneg %p113
      // Predicated region
      $region9: #{tpu_custom_call.1} parent=5 // pred_check
        _
      $region10: #{tpu_custom_call.1} parent=5 // pred_check_branch
        %116 = sbr.rel (%p113) target = $region12
      $region11: #{tpu_custom_call.1} parent=5 // pred_region
        %s117 = ssub.s32 %s14, 1
        // Predicated region
        $region13: #{tpu_custom_call.1} parent=11 // pred_check
          %p118 = pneg %p47
        $region14: #{tpu_custom_call.1} parent=11 // pred_check_branch
          %120 = sbr.rel (%p118) target = $region16
        $region15: #{tpu_custom_call.1} parent=11 // pred_region
          _
        $region16: #{tpu_custom_call.1} parent=11 // pred_fallthru
          _
      $region12: #{tpu_custom_call.1} parent=5 // pred_fallthru
        _
      %p121 = scmp.lt.s32.totalorder %s14, 2
      // Predicated region
      $region17: #{tpu_custom_call.1} parent=5 // pred_check
        %p122 = pneg %p121
      $region18: #{tpu_custom_call.1} parent=5 // pred_check_branch
        %124 = sbr.rel (%p122) target = $region20
      $region19: #{tpu_custom_call.1} parent=5 // pred_region
        // Predicated region
        $region21: #{tpu_custom_call.1} parent=19 // pred_check
          %p125 = pneg %p69
        $region22: #{tpu_custom_call.1} parent=19 // pred_check_branch
          %127 = sbr.rel (%p125) target = $region24
        $region23: #{tpu_custom_call.1} parent=19 // pred_region
          %s128 = sand.u32 %s59, 1
          %s129 = scalar_lea.sflag [#allocation3], %s128
          %s130 = sand.u32 %s59, 1
          %s131 = smul.addr %s130, 8
          %s132 = scalar_lea.vmem [#allocation2], %s131
          %134 = vsyncadd %s129, 0
          %s135 = smul.addr %s21, 2
          %s136 = sadd.s32 %s22, %s135
          %s137 = smul.addr %s136, 8
          %s138 = scalar_lea.hbm %s1, %s137
          %s140 = sshll.u32 %s138, 4
          %s141 = int_to_ptr.hbm [resolvable:$true] %s140
          %s142 = sshll.u32 %s132, 4
          %s143 = int_to_ptr.vmem [resolvable:$true] %s142
          %145 = dma.hbm_to_vmem [thread:$0]  %s141, 128, %s143, %s129
        $region24: #{tpu_custom_call.1} parent=19 // pred_fallthru
          _
      $region20: #{tpu_custom_call.1} parent=5 // pred_fallthru
        _
      %p146 = scmp.le.s32.totalorder 1, %s14
      %p147 = scmp.lt.s32.totalorder %s14, 3
      %p148 = pnand %p146, %p147
      %p149 = pneg %p148
      // Predicated region
      $region25: #{tpu_custom_call.1} parent=5 // pred_check
        _
      $region26: #{tpu_custom_call.1} parent=5 // pred_check_branch
        %151 = sbr.rel (%p148) target = $region28
      $region27: #{tpu_custom_call.1} parent=5 // pred_region
        %s152 = ssub.s32 %s14, 1
        %s153 = sand.u32 %s62, 1
        %s154 = scalar_lea.sflag [#allocation3], %s153
        %s155 = sand.u32 %s62, 1
        %s156 = smul.addr %s155, 8
        %s157 = scalar_lea.vmem [#allocation2], %s156
        // Predicated region
        $region29: #{tpu_custom_call.1} parent=27 // pred_check
          %p158 = pneg %p75
        $region30: #{tpu_custom_call.1} parent=27 // pred_check_branch
          %160 = sbr.rel (%p158) target = $region32
        $region31: #{tpu_custom_call.1} parent=27 // pred_region
          %162 = dma.done %s154, 128
        $region32: #{tpu_custom_call.1} parent=27 // pred_fallthru
          _
        %p163 = pneg %p47
        %p164 = pneg %p44
        %s165 = sand.u32 %s62, 1
        %s166 = scalar_lea.sflag [#allocation3], %s165
        %s167 = sand.u32 %s62, 1
        %s168 = smul.addr %s167, 8
        %s169 = scalar_lea.vmem [#allocation2], %s168
        %p170 = pneg %p75
        %p171 = pneg %p72
        %p172 = pneg %p103
        %p173 = pneg %p100
        %s174 = sand.u32 %s90, 1
        %s175 = scalar_lea.sflag [#allocation4], %s174
        %s176 = sand.u32 %s90, 1
        %s177 = smul.addr %s176, 8
        %s178 = scalar_lea.vmem [#allocation5], %s177
        %s179 = smul.u32 %s23, 8
        %s180 = scalar_lea.vmem %s0, %s179
        %v181 = vld [vmem:[%s180] sm:$0xff]
        %v182 = vld [vmem:[%s157] sm:$0xff]
        %184 = vset.pattern.permute.xlu0 0
        %185 = vperm.xlu0 %184, %v181
        %v186 = vpop.permute.xlu0 %185
        %v188 = vmul.f32 %v182, %v186
        %189 = vst [vmem:[%s178] sm:$0xff] %v188
        %s190 = sand.u32 %s90, 1
        %s191 = scalar_lea.sflag [#allocation4], %s190
        %s192 = sand.u32 %s90, 1
        %s193 = smul.addr %s192, 8
        %s194 = scalar_lea.vmem [#allocation5], %s193
        // Predicated region
        $region33: #{tpu_custom_call.1} parent=27 // pred_check
          %p195 = pneg %p100
        $region34: #{tpu_custom_call.1} parent=27 // pred_check_branch
          %197 = sbr.rel (%p195) target = $region36
        $region35: #{tpu_custom_call.1} parent=27 // pred_region
          %199 = vsyncadd %s191, 0
          %s200 = smul.addr %s23, 2
          %s201 = sadd.s32 %s24, %s200
          %s202 = smul.addr %s201, 8
          %s203 = scalar_lea.hbm %s2, %s202
          %s205 = sshll.u32 %s194, 4
          %s206 = int_to_ptr.vmem [resolvable:$true] %s205
          %s207 = sshll.u32 %s203, 4
          %s208 = int_to_ptr.hbm [resolvable:$true] %s207
          %210 = dma.vmem_to_hbm [thread:$0]  %s206, 128, %s208, %s191
        $region36: #{tpu_custom_call.1} parent=27 // pred_fallthru
          _
      $region28: #{tpu_custom_call.1} parent=5 // pred_fallthru
        _
      %p211 = scmp.le.s32.totalorder 2, %s14
      // Predicated region
      $region37: #{tpu_custom_call.1} parent=5 // pred_check
        %p212 = pneg %p211
      $region38: #{tpu_custom_call.1} parent=5 // pred_check_branch
        %214 = sbr.rel (%p212) target = $region40
      $region39: #{tpu_custom_call.1} parent=5 // pred_region
        %s215 = ssub.s32 %s14, 2
        // Predicated region
        $region41: #{tpu_custom_call.1} parent=39 // pred_check
          %p216 = pneg %p106
        $region42: #{tpu_custom_call.1} parent=39 // pred_check_branch
          %218 = sbr.rel (%p216) target = $region44
        $region43: #{tpu_custom_call.1} parent=39 // pred_region
          %s219 = sand.u32 %s91, 1
          %s220 = scalar_lea.sflag [#allocation4], %s219
          %s221 = sand.u32 %s91, 1
          %s222 = smul.addr %s221, 8
          %s223 = scalar_lea.vmem [#allocation5], %s222
          %225 = dma.done %s220, 128
        $region44: #{tpu_custom_call.1} parent=39 // pred_fallthru
          _
      $region40: #{tpu_custom_call.1} parent=5 // pred_fallthru
        _
    $region6: #{tpu_custom_call.1} parent=1 // loop_footer
      %s18 = sadd.s32 1, %s14
    $region7: #{tpu_custom_call.1} parent=1 // loop_footer_branch
      %13 = sbr.rel target = $region3
    $region8: #{tpu_custom_call.1} parent=1 // loop_exit
      _
    %226 = vsyncpa [#allocation3], 1
    %s227 = scalar_lea.sflag [#allocation3], 1
    %228 = vsyncpa %s227, 1
    %229 = vsyncpa [#allocation4], 1
    %s230 = scalar_lea.sflag [#allocation4], 1
    %231 = vsyncpa %s230, 1

</llo_original>
